<compile_context>
chip_gen: v5e
topology: v5e:2x2
jax: 0.10.0
libtpu: 0.0.40
codegen_flags: <defaults>
</compile_context>

<pallas_src>
import jax
import jax.numpy as jnp
from jax.experimental import pallas as pl
from jax.experimental.pallas import tpu as pltpu

_LANE = 128
_MIN_PALLAS_BYTES = 4 << 20        # below this, fall back to XLA's transpose
_TILE_TARGET_BYTES = 4 << 20       # target size of one input tile (drives TB)
_PIPELINE_VMEM_BUDGET = 32 << 20   # 2 bufs x (in + out) tiles must fit here
_VMEM_LIMIT_BYTES = 48 << 20       # < v7x's 64 MiB physical VMEM, > v5e/v6e defaults


def _round_up(x: int, m: int) -> int:
    return ((x + m - 1) // m) * m


def _cdiv(a: int, b: int) -> int:
    return (a + b - 1) // b


def _tile_plan(B: int, L: int, D: int, itemsize: int) -> tuple[int, int, int]:
    """Pick (TB, TL, TD): dtype-aware lane-aligned tiles plus a batch block."""
    # Scale per-axis tile so a contiguous row is >= 2 KiB regardless of dtype:
    # 512 elem (f32), 1024 (bf16/f16), 2048 (int8/fp8).  Clamp to the
    # 128-aligned extent so tiny axes do not blow up the block.
    scale = max(1, 4 // max(itemsize, 1))
    base = 512 * scale
    TL = min(base, _round_up(max(L, 1), _LANE))
    TD = min(base, _round_up(max(D, 1), _LANE))

    tile_bytes = TL * TD * itemsize
    # Batch block: amortize per-grid-step overhead for small (L, D) while
    # keeping double-buffered (in + out) tiles inside the VMEM budget.
    tb_by_target = max(1, _TILE_TARGET_BYTES // tile_bytes)
    tb_by_vmem = max(1, _PIPELINE_VMEM_BUDGET // (4 * tile_bytes))
    TB = int(min(B, tb_by_target, tb_by_vmem))

    # v7x megacore: keep >= 2 grid steps when possible (neutral elsewhere).
    if _cdiv(L, TL) * _cdiv(D, TD) == 1 and B > 1:
        TB = min(TB, _cdiv(B, 2))
    return TB, TL, TD


def _transpose_kernel(x_ref, o_ref):
    # x_ref block: (TB, TL, TD) ; o_ref block: (TB, TD, TL).
    # Pure data movement on the XLU; no arithmetic, so masked edge-block
    # garbage never contaminates valid output lanes.
    o_ref[...] = jnp.swapaxes(x_ref[...], 1, 2)


def transpose_1_2(x: jax.Array, *, force_pallas: bool = False) -> jax.Array:
    """Pallas equivalent of torch.Tensor.transpose(1, 2).contiguous() on (B, L, D)."""
    assert x.ndim == 3, "this kernel implements Transpose(1, 2) on (B, L, D) inputs"
    B, L, D = x.shape
    itemsize = jnp.dtype(x.dtype).itemsize

    # Small-shape fallback: pallas_call launch + grid overhead dominates.
    if not force_pallas and B * L * D * itemsize < _MIN_PALLAS_BYTES:
        return jnp.swapaxes(x, 1, 2)

    TB, TL, TD = _tile_plan(B, L, D, itemsize)
    # Innermost grid axis walks L-blocks -> consecutive output writebacks are
    # lane-adjacent within the same D band.
    grid = (_cdiv(B, TB), _cdiv(D, TD), _cdiv(L, TL))

    return pl.pallas_call(
        _transpose_kernel,
        out_shape=jax.ShapeDtypeStruct((B, D, L), x.dtype),
        grid_spec=pltpu.PrefetchScalarGridSpec(
            num_scalar_prefetch=0,
            grid=grid,
            in_specs=[pl.BlockSpec((TB, TL, TD), lambda b, j, i: (b, i, j))],
            out_specs=pl.BlockSpec((TB, TD, TL), lambda b, j, i: (b, j, i)),
        ),
        compiler_params=pltpu.CompilerParams(
            dimension_semantics=("parallel", "parallel", "parallel"),
            vmem_limit_bytes=_VMEM_LIMIT_BYTES,
        ),
        cost_estimate=pl.CostEstimate(
            flops=0,
            transcendentals=0,
            bytes_accessed=2 * B * L * D * itemsize,
        ),
    )(x)


class TransposePallas:
    """Mirror of the PyTorch `Transpose` module (fast Pallas path for dims == (1, 2))."""

    def __init__(self, *dims, contiguous: bool = False, force_pallas: bool = False):
        # `contiguous` is a no-op in JAX (results are always materialized).
        self.dims = dims
        self.contiguous = contiguous
        self.force_pallas = force_pallas

    def __call__(self, x: jax.Array) -> jax.Array:
        d = tuple(a % x.ndim for a in self.dims)
        if x.ndim == 3 and sorted(d) == [1, 2]:
            return transpose_1_2(x, force_pallas=self.force_pallas)
        # Generic (non-(1,2)) case: plain axis swap, no Pallas kernel needed.
        return jnp.swapaxes(x, *self.dims)


if __name__ == "__main__":
    key = jax.random.PRNGKey(0)

    # --- 1) Tiny PatchTST-like shape; force the Pallas path so the kernel runs.
    B, L, D = 2, 8, 32
    x_small = jax.random.normal(key, (B, L, D), dtype=jnp.float32)
    module = TransposePallas(1, 2, contiguous=True, force_pallas=True)
    y = jax.block_until_ready(module(x_small))
    assert y.shape == (B, D, L) and y.dtype == x_small.dtype
    assert jnp.array_equal(y, jnp.swapaxes(x_small, 1, 2)), "mismatch (small)"

    # --- 2) Ragged, multi-tile shape: exercises cdiv grid + masked edge blocks.
    x_big = jax.random.normal(jax.random.PRNGKey(1), (2, 1024, 260), dtype=jnp.float32)
    y_big = jax.block_until_ready(transpose_1_2(x_big, force_pallas=True))
    assert y_big.shape == (2, 260, 1024)
    assert jnp.array_equal(y_big, jnp.swapaxes(x_big, 1, 2)), "mismatch (tiled/ragged)"

    # --- 3) bf16 + batch blocking path (dtype-aware tiles, TB > 1).
    x_bf = jax.random.normal(jax.random.PRNGKey(2), (4, 300, 200)).astype(jnp.bfloat16)
    y_bf = jax.block_until_ready(transpose_1_2(x_bf, force_pallas=True))
    assert y_bf.shape == (4, 200, 300)
    assert jnp.array_equal(y_bf, jnp.swapaxes(x_bf, 1, 2)), "mismatch (bf16)"

    # --- 4) Default path on tiny inputs falls back to XLA's native transpose.
    y_fb = jax.block_until_ready(TransposePallas(1, 2, contiguous=True)(x_small))
    assert jnp.array_equal(y_fb, jnp.swapaxes(x_small, 1, 2)), "mismatch (fallback)"

    print("KERNEL_OK")
</pallas_src>

<mosaic_0001>
module attributes {stable_mosaic.version = 11 : i64} {
  func.func @_transpose_kernel(%arg0: i32, %arg1: i32, %arg2: i32, %arg3: memref<1x128x128xf32, #tpu.memory_space<vmem>>, %arg4: memref<1x128x128xf32, #tpu.memory_space<vmem>>) attributes {dimension_semantics = [#tpu.dimension_semantics<parallel>, #tpu.dimension_semantics<parallel>, #tpu.dimension_semantics<parallel>], iteration_bounds = array<i64: 2, 1, 1>, scalar_prefetch = 0 : i64, scratch_operands = 0 : i64, tpu.core_type = #tpu.core_type<tc>, window_params = [{transform_indices = @transform_0, window_bounds = array<i64: 1, 128, 128>}, {transform_indices = @transform_1, window_bounds = array<i64: 1, 128, 128>}]} {
    %c0 = arith.constant 0 : index
    %c0_0 = arith.constant 0 : index
    %c0_1 = arith.constant 0 : index
    %0 = vector.load %arg3[%c0, %c0_0, %c0_1] : memref<1x128x128xf32, #tpu.memory_space<vmem>>, vector<1x128x128xf32>
    %1 = tpu.transpose %0, [0, 2, 1] : vector<1x128x128xf32> -> vector<1x128x128xf32>
    %c0_2 = arith.constant 0 : index
    %c0_3 = arith.constant 0 : index
    %c0_4 = arith.constant 0 : index
    %2 = vector.load %arg4[%c0_2, %c0_3, %c0_4] : memref<1x128x128xf32, #tpu.memory_space<vmem>>, vector<1x128x128xf32>
    tpu.vector_store %arg4[%c0_2, %c0_3, %c0_4], %1 {strides = array<i32>} : memref<1x128x128xf32, #tpu.memory_space<vmem>>, vector<1x128x128xf32>,
    return
  }
  func.func @transform_0(%arg0: i32, %arg1: i32, %arg2: i32) -> (i32, i32, i32) {
    %c0_i32 = arith.constant 0 : i32
    return %arg0, %arg2, %arg1 : i32, i32, i32
  }
  func.func @transform_1(%arg0: i32, %arg1: i32, %arg2: i32) -> (i32, i32, i32) {
    %c0_i32 = arith.constant 0 : i32
    return %arg0, %arg1, %arg2 : i32, i32, i32
  }
}

</mosaic_0001>

<llo_original>
// kernel: tpu_custom_call.1
$region0: #{tpu_custom_call.1}
  #allocation0 [shape = 'u32[]', space=smem, size = 0x4, offset = 0x4, fixed_abs, tag = 'smem constant byte address 0x4 - core index']
  #allocation1 [shape = 'u32[72,128]{1,0:T(1,128)}', space=vmem, size = 0x9000, scoped, tag = 'internal scratch']
  %s0 = inlined_call_operand.hbm [shape: f32[2,8,32], index: 0, kind: input, shape index: {}]
  %s1 = inlined_call_operand.vmem [shape: f32[2,32,8], index: 1, kind: output, shape index: {}]
  %s2 = sld [smem:[#allocation0]]
  $region89: #{tpu_custom_call.1} parent=0
    _
  %s4 = ssub.s32 1, %s2
  %s5 = scalar_select 0, %s4, %s2
  $region1: #{tpu_custom_call.1} parent=0
    #allocation2 [shape = 'u8[131072]{0}', space=vmem, size = 0x20000, scoped, tag = 'input window, operand 0']
    #allocation3 [shape = 's32[2]{0}', space=sflag, size = 0x8, scoped, tag = 'scoped memory for tpu_custom_call.1']
    #allocation4 [shape = 'u8[131072]{0}', space=vmem, size = 0x20000, scoped, tag = 'output window, operand 0']
    %6 = vsyncpa [#allocation3], 0
    %s7 = scalar_lea.sflag [#allocation3], 1
    %8 = vsyncpa %s7, 0
    loop: start=0, step=1, limit=4
    $region2: #{tpu_custom_call.1} parent=1 // loop_pre_header
      _
    $region3: #{tpu_custom_call.1} parent=1 // loop_header
      %s10 = sphi 0, %s14
      %p11 = scmp.ge.s32.totalorder %s10, 4
      %s17 = sphi 0, %s36
      %s18 = sphi 0, %s32
      %s19 = sphi 0, %s28
      %s20 = sphi 0, %s17
      %s21 = sphi 0, %s18
      %s22 = sphi 0, %s19
      %s23 = sphi 0, %s20
      %s24 = sphi 0, %s21
      %s25 = sphi 0, %s22
      %s43 = sphi 0, %s45
      %s46 = sphi 0, %s43
      %s47 = sphi 0, %s46
      %s63 = sphi 0, %s47
      %s73 = sphi 0, %s75
      %s76 = sphi 0, %s73
      %s77 = sphi 0, %s76
      %s93 = sphi 0, %s77
    $region4: #{tpu_custom_call.1} parent=1 // loop_header_branch
      %13 = sbr.rel (%p11) target = $region8
    $region5: #{tpu_custom_call.1} parent=1 // loop_body
      %s15 = ssub.s32 %s10, 1
      %s16 = ssub.s32 %s10, 2
      %s26 = sadd.s32 1, %s19
      %p27 = scmp.ge.s32.totalorder %s26, 1
      %s28 = scalar_select %p27, 0, %s26
      %s29 = sadd.s32 1, %s18
      %s30 = scalar_select %p27, %s29, %s18
      %p31 = scmp.ge.s32.totalorder %s30, 1
      %s32 = scalar_select %p31, 0, %s30
      %s33 = sadd.s32 1, %s17
      %s34 = scalar_select %p31, %s33, %s17
      %p35 = scmp.ge.s32.totalorder %s34, 2
      %s36 = scalar_select %p35, 0, %s34
      %s37 = ssub.s32 %s17, %s36
      %s38 = ssub.s32 %s19, %s28
      %s39 = sor.u32 %s37, %s38
      %s40 = ssub.s32 %s18, %s32
      %s41 = sor.u32 %s39, %s40
      %p42 = scmp.eq.s32.totalorder %s41, 0
      %s44 = sadd.s32 %s43, 1
      %s45 = scalar_select %p42, %s43, %s44
      %p48 = pneg %p42
      %p49 = scmp.eq.s32.totalorder %s10, 1
      %p50 = por %p48, %p49
      %p51 = scmp.ne.s32.totalorder %s43, %s46
      %p52 = scmp.eq.s32.totalorder %s10, 0
      %p53 = por %p51, %p52
      %p54 = scmp.ne.s32.totalorder %s43, %s46
      %p55 = scmp.eq.s32.totalorder %s15, 1
      %p56 = por %p54, %p55
      %p57 = scmp.ne.s32.totalorder %s46, %s47
      %p58 = scmp.eq.s32.totalorder %s15, 0
      %p59 = por %p57, %p58
      %p60 = scmp.ne.s32.totalorder %s46, %s47
      %p61 = scmp.eq.s32.totalorder %s16, 1
      %p62 = por %p60, %p61
      %p64 = scmp.ne.s32.totalorder %s47, %s63
      %p65 = scmp.eq.s32.totalorder %s16, 0
      %p66 = por %p64, %p65
      %s67 = ssub.s32 %s17, %s36
      %s68 = ssub.s32 %s18, %s32
      %s69 = sor.u32 %s67, %s68
      %s70 = ssub.s32 %s19, %s28
      %s71 = sor.u32 %s69, %s70
      %p72 = scmp.eq.s32.totalorder %s71, 0
      %s74 = sadd.s32 %s73, 1
      %s75 = scalar_select %p72, %s73, %s74
      %p78 = pneg %p72
      %p79 = scmp.eq.s32.totalorder %s10, 1
      %p80 = por %p78, %p79
      %p81 = scmp.ne.s32.totalorder %s73, %s76
      %p82 = scmp.eq.s32.totalorder %s10, 0
      %p83 = por %p81, %p82
      %p84 = scmp.ne.s32.totalorder %s73, %s76
      %p85 = scmp.eq.s32.totalorder %s15, 1
      %p86 = por %p84, %p85
      %p87 = scmp.ne.s32.totalorder %s76, %s77
      %p88 = scmp.eq.s32.totalorder %s15, 0
      %p89 = por %p87, %p88
      %p90 = scmp.ne.s32.totalorder %s76, %s77
      %p91 = scmp.eq.s32.totalorder %s16, 1
      %p92 = por %p90, %p91
      %p94 = scmp.ne.s32.totalorder %s77, %s93
      %p95 = scmp.eq.s32.totalorder %s16, 0
      %p96 = por %p94, %p95
      %p97 = scmp.le.s32.totalorder 1, %s10
      %p98 = scmp.lt.s32.totalorder %s10, 3
      %p99 = pnand %p97, %p98
      %p100 = pneg %p99
      // Predicated region
      $region9: #{tpu_custom_call.1} parent=5 // pred_check
        _
      $region10: #{tpu_custom_call.1} parent=5 // pred_check_branch
        %102 = sbr.rel (%p99) target = $region12
      $region11: #{tpu_custom_call.1} parent=5 // pred_region
        %s103 = ssub.s32 %s10, 1
      $region12: #{tpu_custom_call.1} parent=5 // pred_fallthru
        _
      %p104 = scmp.lt.s32.totalorder %s10, 2
      // Predicated region
      $region13: #{tpu_custom_call.1} parent=5 // pred_check
        %p105 = pneg %p104
      $region14: #{tpu_custom_call.1} parent=5 // pred_check_branch
        %107 = sbr.rel (%p105) target = $region16
      $region15: #{tpu_custom_call.1} parent=5 // pred_region
        // Predicated region
        $region17: #{tpu_custom_call.1} parent=15 // pred_check
          %p108 = pneg %p53
        $region18: #{tpu_custom_call.1} parent=15 // pred_check_branch
          %110 = sbr.rel (%p108) target = $region20
        $region19: #{tpu_custom_call.1} parent=15 // pred_region
          %s111 = sand.u32 %s43, 1
          %s112 = scalar_lea.sflag [#allocation3], %s111
          %s113 = sand.u32 %s43, 1
          %s114 = smul.addr %s113, 128
          %s115 = scalar_lea.vmem [#allocation2], %s114
          %s116 = smul.u32 16, %s19
          %s117 = ssub.s32 1, %s116
          %s118 = smul.u32 8, %s117
          %s119 = ssub.s32 128, %s118
          %s120 = sshll.u32 %s119, 4
          %121 = vsyncadd %s112, %s120
          %p122 = scmp.ne.s32.totalorder 0, %s118
          %s123 = sadd.s32 %s18, %s116
          %s124 = sadd.s32 %s123, %s17
          %s125 = smul.addr %s124, 8
          %s126 = scalar_lea.hbm %s0, %s125
          %s127 = smul.u32 8, %s117
          %s128 = sshll.u32 %s126, 4
          %s129 = int_to_ptr.hbm [resolvable:$true] %s128
          %s130 = sshll.u32 %s115, 4
          %s131 = int_to_ptr.vmem [resolvable:$true] %s130
          %s132 = sshll.u32 %s127, 4
          %136 = dma.hbm_to_vmem [thread:$0]  (%p122), %s129, %s132, %s131, %s112, 128, 128, 8
        $region20: #{tpu_custom_call.1} parent=15 // pred_fallthru
          _
      $region16: #{tpu_custom_call.1} parent=5 // pred_fallthru
        _
      %p137 = scmp.le.s32.totalorder 1, %s10
      %p138 = scmp.lt.s32.totalorder %s10, 3
      %p139 = pnand %p137, %p138
      %p140 = pneg %p139
      // Predicated region
      $region21: #{tpu_custom_call.1} parent=5 // pred_check
        _
      $region22: #{tpu_custom_call.1} parent=5 // pred_check_branch
        %142 = sbr.rel (%p139) target = $region24
      $region23: #{tpu_custom_call.1} parent=5 // pred_region
        %s143 = ssub.s32 %s10, 1
        %s144 = sand.u32 %s46, 1
        %s145 = scalar_lea.sflag [#allocation3], %s144
        %s146 = sand.u32 %s46, 1
        %s147 = smul.addr %s146, 128
        %s148 = scalar_lea.vmem [#allocation2], %s147
        // Predicated region
        $region25: #{tpu_custom_call.1} parent=23 // pred_check
          %p149 = pneg %p59
        $region26: #{tpu_custom_call.1} parent=23 // pred_check_branch
          %151 = sbr.rel (%p149) target = $region28
        $region27: #{tpu_custom_call.1} parent=23 // pred_region
          %153 = dma.done %s145, 2048
        $region28: #{tpu_custom_call.1} parent=23 // pred_fallthru
          _
        %s154 = sand.u32 %s46, 1
        %s155 = scalar_lea.sflag [#allocation3], %s154
        %s156 = sand.u32 %s46, 1
        %s157 = smul.addr %s156, 128
        %s158 = scalar_lea.vmem [#allocation2], %s157
        %p159 = pneg %p59
        %p160 = pneg %p56
        %p161 = pneg %p89
        %p162 = pneg %p86
        %s163 = sand.u32 %s76, 1
        %s164 = sand.u32 %s76, 1
        %s165 = smul.addr %s164, 128
        %s166 = scalar_lea.vmem [#allocation4], %s165
        %s167 = smul.u32 16, %s22
        %s168 = ssub.s32 1, %s167
        %s169 = smul.u32 8, %s168
        %s170 = smul.u32 16, %s21
        %s171 = ssub.s32 4, %s170
        %s172 = smul.u32 8, %s171
        %v173 = vld [vmem:[%s148] sm:$0xff]
        %v174 = vld [vmem:[%s148 + $0x8] sm:$0xff]
        %v175 = vld [vmem:[%s148 + $0x10] sm:$0xff]
        %v176 = vld [vmem:[%s148 + $0x18] sm:$0xff]
        %v177 = vld [vmem:[%s148 + $0x20] sm:$0xff]
        %v178 = vld [vmem:[%s148 + $0x28] sm:$0xff]
        %v179 = vld [vmem:[%s148 + $0x30] sm:$0xff]
        %v180 = vld [vmem:[%s148 + $0x38] sm:$0xff]
        %v181 = vld [vmem:[%s148 + $0x40] sm:$0xff]
        %v182 = vld [vmem:[%s148 + $0x48] sm:$0xff]
        %v183 = vld [vmem:[%s148 + $0x50] sm:$0xff]
        %v184 = vld [vmem:[%s148 + $0x58] sm:$0xff]
        %v185 = vld [vmem:[%s148 + $0x60] sm:$0xff]
        %v186 = vld [vmem:[%s148 + $0x68] sm:$0xff]
        %v187 = vld [vmem:[%s148 + $0x70] sm:$0xff]
        %v188 = vld [vmem:[%s148 + $0x78] sm:$0xff]
        %189 = vxpose.xlu0.b32.start [1/16] %v173, 128
        %190 = vxpose.xlu0.b32.cont [2/16] %v174, 128
        %191 = vxpose.xlu0.b32.cont [3/16] %v175, 128
        %192 = vxpose.xlu0.b32.cont [4/16] %v176, 128
        %193 = vxpose.xlu0.b32.cont [5/16] %v177, 128
        %194 = vxpose.xlu0.b32.cont [6/16] %v178, 128
        %195 = vxpose.xlu0.b32.cont [7/16] %v179, 128
        %196 = vxpose.xlu0.b32.cont [8/16] %v180, 128
        %197 = vxpose.xlu0.b32.cont [9/16] %v181, 128
        %198 = vxpose.xlu0.b32.cont [10/16] %v182, 128
        %199 = vxpose.xlu0.b32.cont [11/16] %v183, 128
        %200 = vxpose.xlu0.b32.cont [12/16] %v184, 128
        %201 = vxpose.xlu0.b32.cont [13/16] %v185, 128
        %202 = vxpose.xlu0.b32.cont [14/16] %v186, 128
        %203 = vxpose.xlu0.b32.cont [15/16] %v187, 128
        %204 = vxpose.xlu0.b32.end [16/16] %v188, 128
        %v205 = vpop.trf.xlu0
        %v206 = vpop.trf.xlu0
        %v207 = vpop.trf.xlu0
        %v208 = vpop.trf.xlu0
        %v209 = vpop.trf.xlu0
        %v210 = vpop.trf.xlu0
        %v211 = vpop.trf.xlu0
        %v212 = vpop.trf.xlu0
        %v213 = vpop.trf.xlu0
        %v214 = vpop.trf.xlu0
        %v215 = vpop.trf.xlu0
        %v216 = vpop.trf.xlu0
        %v217 = vpop.trf.xlu0
        %v218 = vpop.trf.xlu0
        %v219 = vpop.trf.xlu0
        %v220 = vpop.trf.xlu0
        %221 = vst [vmem:[%s166] sm:$0xff] %v205
        %222 = vst [vmem:[%s166 + $0x8] sm:$0xff] %v206
        %223 = vst [vmem:[%s166 + $0x10] sm:$0xff] %v207
        %224 = vst [vmem:[%s166 + $0x18] sm:$0xff] %v208
        %225 = vst [vmem:[%s166 + $0x20] sm:$0xff] %v209
        %226 = vst [vmem:[%s166 + $0x28] sm:$0xff] %v210
        %227 = vst [vmem:[%s166 + $0x30] sm:$0xff] %v211
        %228 = vst [vmem:[%s166 + $0x38] sm:$0xff] %v212
        %229 = vst [vmem:[%s166 + $0x40] sm:$0xff] %v213
        %230 = vst [vmem:[%s166 + $0x48] sm:$0xff] %v214
        %231 = vst [vmem:[%s166 + $0x50] sm:$0xff] %v215
        %232 = vst [vmem:[%s166 + $0x58] sm:$0xff] %v216
        %233 = vst [vmem:[%s166 + $0x60] sm:$0xff] %v217
        %234 = vst [vmem:[%s166 + $0x68] sm:$0xff] %v218
        %235 = vst [vmem:[%s166 + $0x70] sm:$0xff] %v219
        %236 = vst [vmem:[%s166 + $0x78] sm:$0xff] %v220
        %s237 = sand.u32 %s76, 1
        %s238 = sand.u32 %s76, 1
        %s239 = smul.addr %s238, 128
        %s240 = scalar_lea.vmem [#allocation4], %s239
        // Predicated region
        $region29: #{tpu_custom_call.1} parent=23 // pred_check
          %p241 = pneg %p86
        $region30: #{tpu_custom_call.1} parent=23 // pred_check_branch
          %243 = sbr.rel (%p241) target = $region32
        $region31: #{tpu_custom_call.1} parent=23 // pred_region
          %s244 = smul.u32 16, %s21
          %s245 = ssub.s32 4, %s244
          %s246 = smul.u32 8, %s245
          %p247 = scmp.ne.s32.totalorder 0, %s246
          %s248 = sadd.s32 %s22, %s244
          %s249 = smul.addr %s20, 4
          %s250 = sadd.s32 %s248, %s249
          %s251 = smul.addr %s250, 8
          %s252 = scalar_lea.vmem %s1, %s251
          // Predicated region
          $region33: #{tpu_custom_call.1} parent=31 // pred_check
            %p253 = pneg %p247
          $region34: #{tpu_custom_call.1} parent=31 // pred_check_branch
            %255 = sbr.rel (%p253) target = $region36
          $region35: #{tpu_custom_call.1} parent=31 // pred_region
            // Predicated region
            $region37: #{tpu_custom_call.1} parent=35 // pred_check
              _
            $region38: #{tpu_custom_call.1} parent=35 // pred_check_branch
              %257 = sbr.rel (0) target = $region40
            $region39: #{tpu_custom_call.1} parent=35 // pred_region
              // Predicated region
              $region59: #{tpu_custom_call.1} parent=39 // pred_check
                _
              $region60: #{tpu_custom_call.1} parent=39 // pred_check_branch
                %313 = sbr.rel (0) target = $region62
              $region61: #{tpu_custom_call.1} parent=39 // pred_region
                %s314 = sshrl.u32 %s245, 2
                // While loop
                $region63: #{tpu_custom_call.1} parent=61 // loop_pre_header
                  _
                $region64: #{tpu_custom_call.1} parent=61 // loop_header
                  %s316 = sphi 0, %s318
                  %p317 = scmp.ge.s32.totalorder %s316, %s314
                  %s321 = sphi 0, %s334
                  %s322 = sphi %s240, %s337
                  %s323 = sphi %s252, %s338
                $region65: #{tpu_custom_call.1} parent=61 // loop_header_branch
                  %320 = sbr.rel (%p317) target = $region69
                $region66: #{tpu_custom_call.1} parent=61 // loop_body
                  %v324 = vld [vmem:[%s322] sm:$0xff]
                  %325 = vst [vmem:[%s323] sm:$0xff] %v324
                  %v326 = vld [vmem:[%s322 + $0x8] sm:$0xff]
                  %327 = vst [vmem:[%s323 + $0x8] sm:$0xff] %v326
                  %v328 = vld [vmem:[%s322 + $0x10] sm:$0xff]
                  %329 = vst [vmem:[%s323 + $0x10] sm:$0xff] %v328
                  %v330 = vld [vmem:[%s322 + $0x18] sm:$0xff]
                  %331 = vst [vmem:[%s323 + $0x18] sm:$0xff] %v330
                  %s332 = sadd.s32 1, %s321
                  %p333 = scmp.ge.s32.totalorder %s332, %s314
                  %s334 = scalar_select %p333, 0, %s332
                  %s335 = smul.u32 %s334, 32
                  %s336 = smul.u32 %s334, 32
                  %s337 = scalar_lea.vmem %s240, %s335 [#allocation4]
                  %s338 = scalar_lea.vmem %s252, %s336
                $region67: #{tpu_custom_call.1} parent=61 // loop_footer
                  %s318 = sadd.s32 %s316, 1
                $region68: #{tpu_custom_call.1} parent=61 // loop_footer_branch
                  %315 = sbr.rel target = $region64
                $region69: #{tpu_custom_call.1} parent=61 // loop_exit
                  _
                %s339 = sshrl.u32 %s245, 2
                %s340 = sand.u32 %s245, 3
                %s341 = smul.u32 %s339, 4
                %s342 = smul.u32 8, %s341
                %s343 = scalar_lea.vmem %s240, %s342 [#allocation4]
                %s344 = smul.u32 8, %s341
                %s345 = scalar_lea.vmem %s252, %s344
                // While loop
                $region70: #{tpu_custom_call.1} parent=61 // loop_pre_header
                  _
                $region71: #{tpu_custom_call.1} parent=61 // loop_header
                  %s347 = sphi 0, %s349
                  %p348 = scmp.ge.s32.totalorder %s347, %s340
                  %s352 = sphi 0, %s359
                  %s353 = sphi %s343, %s362
                  %s354 = sphi %s345, %s363
                $region72: #{tpu_custom_call.1} parent=61 // loop_header_branch
                  %351 = sbr.rel (%p348) target = $region76
                $region73: #{tpu_custom_call.1} parent=61 // loop_body
                  %v355 = vld [vmem:[%s353] sm:$0xff]
                  %356 = vst [vmem:[%s354] sm:$0xff] %v355
                  %s357 = sadd.s32 1, %s352
                  %p358 = scmp.ge.s32.totalorder %s357, %s340
                  %s359 = scalar_select %p358, 0, %s357
                  %s360 = smul.u32 %s359, 8
                  %s361 = smul.u32 %s359, 8
                  %s362 = scalar_lea.vmem %s343, %s360 [#allocation4]
                  %s363 = scalar_lea.vmem %s345, %s361
                $region74: #{tpu_custom_call.1} parent=61 // loop_footer
                  %s349 = sadd.s32 %s347, 1
                $region75: #{tpu_custom_call.1} parent=61 // loop_footer_branch
                  %346 = sbr.rel target = $region71
                $region76: #{tpu_custom_call.1} parent=61 // loop_exit
                  _
              $region62: #{tpu_custom_call.1} parent=39 // pred_fallthru
                _
              // Predicated region
              $region77: #{tpu_custom_call.1} parent=39 // pred_check
                _
              $region78: #{tpu_custom_call.1} parent=39 // pred_check_branch
                %365 = sbr.rel target = $region80
              $region79: #{tpu_custom_call.1} parent=39 // pred_region
                _
              $region80: #{tpu_custom_call.1} parent=39 // pred_fallthru
                _
            $region40: #{tpu_custom_call.1} parent=35 // pred_fallthru
              _
            // Predicated region
            $region41: #{tpu_custom_call.1} parent=35 // pred_check
              _
            $region42: #{tpu_custom_call.1} parent=35 // pred_check_branch
              %259 = sbr.rel target = $region44
            $region43: #{tpu_custom_call.1} parent=35 // pred_region
              %s261 = ssub.s32 256, 1
              %s262 = sshrl.u32 %s245, 2
              // While loop
              $region45: #{tpu_custom_call.1} parent=43 // loop_pre_header
                _
              $region46: #{tpu_custom_call.1} parent=43 // loop_header
                %s264 = sphi 0, %s266
                %p265 = scmp.ge.s32.totalorder %s264, %s262
                %s269 = sphi 0, %s282
                %s270 = sphi %s240, %s285
                %s271 = sphi %s252, %s286
              $region47: #{tpu_custom_call.1} parent=43 // loop_header_branch
                %268 = sbr.rel (%p265) target = $region51
              $region48: #{tpu_custom_call.1} parent=43 // loop_body
                %v272 = vld [vmem:[%s270] sm:%s261]
                %273 = vst [vmem:[%s271] sm:%s261] %v272
                %v274 = vld [vmem:[%s270 + $0x8] sm:%s261]
                %275 = vst [vmem:[%s271 + $0x8] sm:%s261] %v274
                %v276 = vld [vmem:[%s270 + $0x10] sm:%s261]
                %277 = vst [vmem:[%s271 + $0x10] sm:%s261] %v276
                %v278 = vld [vmem:[%s270 + $0x18] sm:%s261]
                %279 = vst [vmem:[%s271 + $0x18] sm:%s261] %v278
                %s280 = sadd.s32 1, %s269
                %p281 = scmp.ge.s32.totalorder %s280, %s262
                %s282 = scalar_select %p281, 0, %s280
                %s283 = smul.u32 %s282, 32
                %s284 = smul.u32 %s282, 32
                %s285 = scalar_lea.vmem %s240, %s283 [#allocation4]
                %s286 = scalar_lea.vmem %s252, %s284
              $region49: #{tpu_custom_call.1} parent=43 // loop_footer
                %s266 = sadd.s32 %s264, 1
              $region50: #{tpu_custom_call.1} parent=43 // loop_footer_branch
                %263 = sbr.rel target = $region46
              $region51: #{tpu_custom_call.1} parent=43 // loop_exit
                _
              %s287 = sshrl.u32 %s245, 2
              %s288 = sand.u32 %s245, 3
              %s289 = smul.u32 %s287, 4
              %s290 = smul.u32 8, %s289
              %s291 = scalar_lea.vmem %s240, %s290 [#allocation4]
              %s292 = smul.u32 8, %s289
              %s293 = scalar_lea.vmem %s252, %s292
              // While loop
              $region52: #{tpu_custom_call.1} parent=43 // loop_pre_header
                _
              $region53: #{tpu_custom_call.1} parent=43 // loop_header
                %s295 = sphi 0, %s297
                %p296 = scmp.ge.s32.totalorder %s295, %s288
                %s300 = sphi 0, %s307
                %s301 = sphi %s291, %s310
                %s302 = sphi %s293, %s311
              $region54: #{tpu_custom_call.1} parent=43 // loop_header_branch
                %299 = sbr.rel (%p296) target = $region58
              $region55: #{tpu_custom_call.1} parent=43 // loop_body
                %v303 = vld [vmem:[%s301] sm:%s261]
                %304 = vst [vmem:[%s302] sm:%s261] %v303
                %s305 = sadd.s32 1, %s300
                %p306 = scmp.ge.s32.totalorder %s305, %s288
                %s307 = scalar_select %p306, 0, %s305
                %s308 = smul.u32 %s307, 8
                %s309 = smul.u32 %s307, 8
                %s310 = scalar_lea.vmem %s291, %s308 [#allocation4]
                %s311 = scalar_lea.vmem %s293, %s309
              $region56: #{tpu_custom_call.1} parent=43 // loop_footer
                %s297 = sadd.s32 %s295, 1
              $region57: #{tpu_custom_call.1} parent=43 // loop_footer_branch
                %294 = sbr.rel target = $region53
              $region58: #{tpu_custom_call.1} parent=43 // loop_exit
                _
            $region44: #{tpu_custom_call.1} parent=35 // pred_fallthru
              _
          $region36: #{tpu_custom_call.1} parent=31 // pred_fallthru
            _
          %366 = vnop
        $region32: #{tpu_custom_call.1} parent=23 // pred_fallthru
          _
      $region24: #{tpu_custom_call.1} parent=5 // pred_fallthru
        _
      %p367 = scmp.le.s32.totalorder 2, %s10
      // Predicated region
      $region81: #{tpu_custom_call.1} parent=5 // pred_check
        %p368 = pneg %p367
      $region82: #{tpu_custom_call.1} parent=5 // pred_check_branch
        %370 = sbr.rel (%p368) target = $region84
      $region83: #{tpu_custom_call.1} parent=5 // pred_region
        %s371 = ssub.s32 %s10, 2
        // Predicated region
        $region85: #{tpu_custom_call.1} parent=83 // pred_check
          %p372 = pneg %p92
        $region86: #{tpu_custom_call.1} parent=83 // pred_check_branch
          %374 = sbr.rel (%p372) target = $region88
        $region87: #{tpu_custom_call.1} parent=83 // pred_region
          %s375 = sand.u32 %s77, 1
          %s376 = sand.u32 %s77, 1
          %s377 = smul.addr %s376, 128
          %s378 = scalar_lea.vmem [#allocation4], %s377
        $region88: #{tpu_custom_call.1} parent=83 // pred_fallthru
          _
      $region84: #{tpu_custom_call.1} parent=5 // pred_fallthru
        _
    $region6: #{tpu_custom_call.1} parent=1 // loop_footer
      %s14 = sadd.s32 1, %s10
    $region7: #{tpu_custom_call.1} parent=1 // loop_footer_branch
      %9 = sbr.rel target = $region3
    $region8: #{tpu_custom_call.1} parent=1 // loop_exit
      _
    %379 = vsyncpa [#allocation3], 1
    %s380 = scalar_lea.sflag [#allocation3], 1
    %381 = vsyncpa %s380, 1

</llo_original>
